<compile_context>
chip_gen: v6e
topology: v6e:2x2x1
jax: 0.10.0
libtpu: 0.0.40
codegen_flags: <defaults>
</compile_context>

<pallas_src>
import math
from collections import namedtuple

import jax
import jax.numpy as jnp
from jax.experimental import pallas as pl
from jax.experimental.pallas import tpu as pltpu


def _round_up(x, m):
    return ((x + m - 1) // m) * m


# --------------------------------------------------------------------------- #
# Kernels
# --------------------------------------------------------------------------- #
def _mlp_kernel_direct(x_ref, w1_ref, b1_ref, w2_ref, b2_ref, o_ref):
    """Single hidden step (weights resident): no accumulator scratch needed."""
    h = jnp.dot(x_ref[...], w1_ref[...], preferred_element_type=jnp.float32)
    h = jnp.maximum(h + b1_ref[...], 0.0)
    o_ref[...] = (jnp.dot(h.astype(w2_ref.dtype), w2_ref[...],
                          preferred_element_type=jnp.float32)
                  + b2_ref[...]).astype(o_ref.dtype)


def _mlp_kernel_acc(x_ref, w1_ref, b1_ref, w2_ref, b2_ref, o_ref, acc_ref):
    """Hidden dimension streamed: f32 accumulator with pl.when init/finalize."""
    k = pl.program_id(2)

    @pl.when(k == 0)
    def _init():
        acc_ref[...] = jnp.zeros_like(acc_ref)

    # fc1 slice over the hidden dim: [tB, Din] @ [Din, tH] -> f32 on the MXU.
    h = jnp.dot(x_ref[...], w1_ref[...], preferred_element_type=jnp.float32)
    # bias + ReLU in f32 (per-hidden-unit, so H-tiling is exact).
    h = jnp.maximum(h + b1_ref[...], 0.0)
    # fc2 partial product for this hidden tile.
    acc_ref[...] += jnp.dot(h.astype(w2_ref.dtype), w2_ref[...],
                            preferred_element_type=jnp.float32)

    @pl.when(k == pl.num_programs(2) - 1)
    def _finalize():
        o_ref[...] = (acc_ref[...] + b2_ref[...]).astype(o_ref.dtype)


# --------------------------------------------------------------------------- #
# Planning (per-generation VMEM budget, tile selection)
# --------------------------------------------------------------------------- #
Plan = namedtuple(
    "Plan",
    ["d_in", "hidden", "d_out", "d_in_p", "h_pad", "d_out_p",
     "block_b", "block_h", "block_j", "compute_dtype", "out_dtype",
     "vmem_limit"])


def _physical_vmem_bytes():
    try:
        info = pltpu.get_tpu_info()
        for attr in ("vmem_capacity_bytes", "vmem_size_bytes", "vmem_bytes"):
            v = getattr(info, attr, None)
            if v:
                return int(v)
    except Exception:
        pass
    return 64 << 20  # conservative default: v7x per-TensorCore VMEM


def _vmem_budget():
    # ~20% headroom for Mosaic internal scratch / pipeline bookkeeping:
    # ~51 MiB on v7x (64 MiB physical), ~102 MiB on v5e/v6e (128 MiB physical).
    return int(_physical_vmem_bytes() * 0.8)


def _footprint_bytes(bb, bh, bj, d_in_p, isz, osz, nk):
    """Double-buffered tile footprint estimate (biases sublane-padded to 8)."""
    f = 2 * (bb * d_in_p * isz        # x tile
             + d_in_p * bh * isz      # w1 tile
             + 8 * bh * 4             # b1 tile (f32)
             + bh * bj * isz          # w2 tile
             + 8 * bj * 4             # b2 tile (f32)
             + bb * bj * osz)         # out tile
    if nk > 1:
        f += bb * bj * 4              # f32 accumulator scratch
    return f


def _hbm_traffic(b_p, d_in_p, h_pad, d_out_p, nb, nj, nk, isz, osz):
    """Consecutive-block-index DMA traffic model for the chosen grid order."""
    w1_bytes = d_in_p * h_pad * isz
    w2_bytes = h_pad * d_out_p * isz
    x_t = b_p * d_in_p * isz                               # x block only changes with i
    o_t = b_p * d_out_p * osz
    w1_t = w1_bytes if nk == 1 else nb * nj * w1_bytes     # constant map => once
    w2_t = w2_bytes if (nk == 1 and nj == 1) else max(nb, 1) * w2_bytes
    bias_t = (h_pad + d_out_p) * 4
    return int(x_t + o_t + w1_t + w2_t + bias_t)


def plan_mlp(batch, d_in, hidden, d_out, *, compute_dtype=jnp.float32,
             out_dtype=jnp.float32, block_b=None, block_h=None, block_j=None):
    """Pick padded dims + tile sizes for the given problem and this TPU's VMEM."""
    compute_dtype = jnp.dtype(compute_dtype)
    out_dtype = jnp.dtype(out_dtype)
    isz = compute_dtype.itemsize
    osz = out_dtype.itemsize
    sub = max(8, 32 // isz)                  # sublane multiple (8 f32 / 16 bf16)

    d_in_p = _round_up(d_in, 128)
    d_out_p0 = _round_up(d_out, 128)
    h_128 = _round_up(hidden, 128)
    budget = _vmem_budget()

    # Batch-tile candidates (largest first, sublane-aligned).
    if block_b is not None:
        bb_opts = [_round_up(block_b, sub)]
    else:
        bb_max = min(512 if isz >= 4 else 1024, _round_up(max(batch, 1), sub))
        bb_opts, v = [], bb_max
        while v >= sub:
            r = _round_up(v, sub)
            if r not in bb_opts:
                bb_opts.append(r)
            v //= 2
        if sub not in bb_opts:
            bb_opts.append(sub)

    # Hidden-tile candidates: fully resident first, then streamed.
    if block_h is not None:
        bh_opts = [_round_up(block_h, 128)]
    else:
        bh_opts = [h_128] + [h for h in (512, 256, 128) if h < h_128]

    # Output-column-tile candidates: untiled first.
    if block_j is not None:
        bj_opts = [_round_up(block_j, 128)]
    else:
        bj_opts = [d_out_p0] + [j for j in (512, 256, 128)
                                if j < d_out_p0 and d_out_p0 % j == 0]

    best_key, best_cfg = None, None
    for bh in bh_opts:
        h_pad = _round_up(hidden, bh)
        nk = h_pad // bh
        for bj in bj_opts:
            d_out_pad = _round_up(d_out, bj)
            nj = d_out_pad // bj
            for bb in bb_opts:
                b_p = _round_up(max(batch, 1), bb)
                nb = b_p // bb
                foot = _footprint_bytes(bb, bh, bj, d_in_p, isz, osz, nk)
                if foot > budget:
                    continue
                traffic = _hbm_traffic(b_p, d_in_p, h_pad, d_out_pad,
                                       nb, nj, nk, isz, osz)
                steps = nb * nj * nk
                score = traffic + steps * 350_000   # ~0.35 us/step @ ~1 TB/s
                key = (score, -bb, nk, nj)
                if best_key is None or key < best_key:
                    best_key, best_cfg = key, (bb, bh, bj, h_pad, d_out_pad)

    if best_cfg is None:
        # Nothing met the budget estimate: fall back to the smallest config.
        bb, bh, bj = bb_opts[-1], bh_opts[-1], bj_opts[-1]
        best_cfg = (bb, bh, bj, _round_up(hidden, bh), _round_up(d_out, bj))

    bb, bh, bj, h_pad, d_out_pad = best_cfg
    nk = h_pad // bh
    b_p = _round_up(max(batch, 1), bb)
    nb = b_p // bb
    nj = d_out_pad // bj

    # v7x has 2 TensorCores sharded over "parallel" grid axes: make sure there
    # are >= 2 parallel steps when it costs no extra HBM traffic (nb == 1).
    if block_j is None and nk == 1 and nb * nj < 2 and d_out_pad >= 256:
        for cand in (d_out_pad // 2, 256, 128):
            if cand >= 128 and cand % 128 == 0 and d_out_pad % cand == 0:
                bj = cand
                break

    foot = _footprint_bytes(bb, bh, bj, d_in_p, isz, osz, nk)
    vmem_limit = int(min(budget, max(foot + (8 << 20), 32 << 20)))

    return Plan(d_in=d_in, hidden=hidden, d_out=d_out,
                d_in_p=d_in_p, h_pad=h_pad, d_out_p=d_out_pad,
                block_b=bb, block_h=bh, block_j=bj,
                compute_dtype=compute_dtype, out_dtype=out_dtype,
                vmem_limit=vmem_limit)


# --------------------------------------------------------------------------- #
# Parameter preparation (one-time: pad + cast, hoisted out of the call path)
# --------------------------------------------------------------------------- #
def prepare_params(w1, b1, w2, b2, plan):
    """Zero-pad + cast weights once.  Padding is exact: padded hidden columns
    yield relu(0 + 0) = 0 and hit zero rows of W2."""
    cd = plan.compute_dtype
    w1p = jnp.pad(w1, ((0, plan.d_in_p - plan.d_in),
                       (0, plan.h_pad - plan.hidden))).astype(cd)
    b1p = jnp.pad(b1, (0, plan.h_pad - plan.hidden)).astype(jnp.float32)
    b1p = b1p.reshape(1, plan.h_pad)
    w2p = jnp.pad(w2, ((0, plan.h_pad - plan.hidden),
                       (0, plan.d_out_p - plan.d_out))).astype(cd)
    b2p = jnp.pad(b2, (0, plan.d_out_p - plan.d_out)).astype(jnp.float32)
    b2p = b2p.reshape(1, plan.d_out_p)
    return w1p, b1p, w2p, b2p


# --------------------------------------------------------------------------- #
# Forward
# --------------------------------------------------------------------------- #
def mlp_forward_prepared(x, prepared, plan):
    """relu(x @ W1 + b1) @ W2 + b2 with pre-padded/cast weights."""
    w1p, b1p, w2p, b2p = prepared
    B, d_in = x.shape
    assert d_in == plan.d_in, "input feature dim mismatch with plan"

    cd = plan.compute_dtype
    isz = jnp.dtype(cd).itemsize
    osz = jnp.dtype(plan.out_dtype).itemsize
    sub = max(8, 32 // isz)

    bb = _round_up(min(plan.block_b, _round_up(B, sub)), sub)
    B_p = _round_up(B, bb)
    nb = B_p // bb
    nj = plan.d_out_p // plan.block_j
    nk = plan.h_pad // plan.block_h
    multi_k = nk > 1

    if (B_p != B) or (plan.d_in_p != d_in) or (x.dtype != cd):
        xp = jnp.pad(x, ((0, B_p - B), (0, plan.d_in_p - d_in))).astype(cd)
    else:
        xp = x

    kernel = _mlp_kernel_acc if multi_k else _mlp_kernel_direct
    scratch = ([pltpu.VMEM((bb, plan.block_j), jnp.float32)] if multi_k else [])

    flops = int(2 * B_p * (plan.d_in_p * plan.h_pad + plan.h_pad * plan.d_out_p))
    bytes_accessed = _hbm_traffic(B_p, plan.d_in_p, plan.h_pad, plan.d_out_p,
                                  nb, nj, nk, isz, osz)

    out_p = pl.pallas_call(
        kernel,
        out_shape=jax.ShapeDtypeStruct((B_p, plan.d_out_p), plan.out_dtype),
        grid_spec=pltpu.PrefetchScalarGridSpec(
            num_scalar_prefetch=0,
            grid=(nb, nj, nk),
            in_specs=[
                pl.BlockSpec((bb, plan.d_in_p), lambda i, j, k: (i, 0)),   # x
                pl.BlockSpec((plan.d_in_p, plan.block_h),
                             lambda i, j, k: (0, k)),                      # w1
                pl.BlockSpec((1, plan.block_h), lambda i, j, k: (0, k)),   # b1
                pl.BlockSpec((plan.block_h, plan.block_j),
                             lambda i, j, k: (k, j)),                      # w2
                pl.BlockSpec((1, plan.block_j), lambda i, j, k: (0, j)),   # b2
            ],
            out_specs=pl.BlockSpec((bb, plan.block_j), lambda i, j, k: (i, j)),
            scratch_shapes=scratch,
        ),
        compiler_params=pltpu.CompilerParams(
            dimension_semantics=("parallel", "parallel", "arbitrary"),
            vmem_limit_bytes=plan.vmem_limit,
        ),
        cost_estimate=pl.CostEstimate(
            flops=flops, transcendentals=0, bytes_accessed=bytes_accessed),
    )(xp, w1p, b1p, w2p, b2p)

    return out_p[:B, :plan.d_out]


def mlp_forward(x, w1, b1, w2, b2, *, compute_dtype=None,
                block_b=None, block_h=None, block_j=None):
    """Convenience wrapper: plan + prepare + forward in one call.

    x : [B, D_in];  w1: [D_in, H], b1: [H];  w2: [H, D_out], b2: [D_out]
    (weights stored as [in, out], i.e. transposed vs. torch nn.Linear.weight)
    """
    if compute_dtype is None:
        compute_dtype = x.dtype
    plan = plan_mlp(x.shape[0], w1.shape[0], w1.shape[1], w2.shape[1],
                    compute_dtype=compute_dtype, out_dtype=x.dtype,
                    block_b=block_b, block_h=block_h, block_j=block_j)
    prepared = prepare_params(w1, b1, w2, b2, plan)
    return mlp_forward_prepared(x, prepared, plan)


def init_params(key, input_dim, hidden_dim, output_dim, dtype=jnp.float32):
    """Deterministic init mimicking torch.nn.Linear (uniform +/- 1/sqrt(fan_in)).
    Weights stored already transposed: [in, out]."""
    k1, k2, k3, k4 = jax.random.split(key, 4)
    bound1 = 1.0 / math.sqrt(input_dim)
    bound2 = 1.0 / math.sqrt(hidden_dim)
    w1 = jax.random.uniform(k1, (input_dim, hidden_dim), dtype, -bound1, bound1)
    b1 = jax.random.uniform(k2, (hidden_dim,), dtype, -bound1, bound1)
    w2 = jax.random.uniform(k3, (hidden_dim, output_dim), dtype, -bound2, bound2)
    b2 = jax.random.uniform(k4, (output_dim,), dtype, -bound2, bound2)
    return w1, b1, w2, b2


if __name__ == "__main__":
    key = jax.random.PRNGKey(0)
    kx, kp, kx2, kp2 = jax.random.split(key, 4)

    # Small shapes consistent with the module spec.
    B, input_dim, hidden_dim, output_dim = 8, 32, 64, 16
    x = jax.random.normal(kx, (B, input_dim), jnp.float32)
    w1, b1, w2, b2 = init_params(kp, input_dim, hidden_dim, output_dim)
    ref = jnp.maximum(x @ w1 + b1, 0.0) @ w2 + b2

    # f32 path (weights resident, direct-write kernel, no accumulator scratch).
    out = jax.block_until_ready(mlp_forward(x, w1, b1, w2, b2))
    assert out.shape == (B, output_dim)
    assert jnp.allclose(out, ref, atol=5e-3, rtol=5e-3)

    # bf16 MXU path (f32 accumulation / bias / ReLU), looser tolerance.
    out_bf16 = jax.block_until_ready(
        mlp_forward(x, w1, b1, w2, b2, compute_dtype=jnp.bfloat16))
    assert jnp.allclose(out_bf16, ref, atol=8e-2, rtol=8e-2)

    # Larger ragged batch: default plan keeps weights resident in VMEM and
    # splits D_out into two parallel tiles (feeds v7x's second TensorCore).
    B2, D2, H2, O2 = 300, 256, 640, 192
    x2 = jax.random.normal(kx2, (B2, D2), jnp.float32)
    w1b, b1b, w2b, b2b = init_params(kp2, D2, H2, O2)
    ref2 = jnp.maximum(x2 @ w1b + b1b, 0.0) @ w2b + b2b

    plan_res = plan_mlp(B2, D2, H2, O2)
    prep_res = prepare_params(w1b, b1b, w2b, b2b, plan_res)   # one-time pad/cast
    out2 = jax.block_until_ready(mlp_forward_prepared(x2, prep_res, plan_res))
    assert out2.shape == (B2, O2)
    assert jnp.allclose(out2, ref2, atol=5e-3, rtol=5e-3)

    # Forced streaming / multi-tile fallback path (accumulator kernel):
    # grid = (3 batch tiles, 2 out tiles, 3 hidden tiles), H padded 640 -> 768.
    plan_strm = plan_mlp(B2, D2, H2, O2, block_b=128, block_h=256, block_j=128)
    prep_strm = prepare_params(w1b, b1b, w2b, b2b, plan_strm)
    out3 = jax.block_until_ready(mlp_forward_prepared(x2, prep_strm, plan_strm))
    assert out3.shape == (B2, O2)
    assert jnp.allclose(out3, ref2, atol=5e-3, rtol=5e-3)

    print("KERNEL_OK")
</pallas_src>

<mosaic_0001>
module attributes {stable_mosaic.version = 11 : i64} {
  func.func @_mlp_kernel_direct(%arg0: i32, %arg1: i32, %arg2: i32, %arg3: memref<8x128xf32, #tpu.memory_space<vmem>>, %arg4: memref<128x128xf32, #tpu.memory_space<vmem>>, %arg5: memref<1x128xf32, #tpu.memory_space<vmem>>, %arg6: memref<128x128xf32, #tpu.memory_space<vmem>>, %arg7: memref<1x128xf32, #tpu.memory_space<vmem>>, %arg8: memref<8x128xf32, #tpu.memory_space<vmem>>) attributes {dimension_semantics = [#tpu.dimension_semantics<parallel>, #tpu.dimension_semantics<parallel>, #tpu.dimension_semantics<arbitrary>], iteration_bounds = array<i64: 1, 1, 1>, scalar_prefetch = 0 : i64, scratch_operands = 0 : i64, tpu.core_type = #tpu.core_type<tc>, window_params = [{transform_indices = @transform_0, window_bounds = array<i64: 8, 128>}, {transform_indices = @transform_1, window_bounds = array<i64: 128, 128>}, {transform_indices = @transform_2, window_bounds = array<i64: 1, 128>}, {transform_indices = @transform_3, window_bounds = array<i64: 128, 128>}, {transform_indices = @transform_4, window_bounds = array<i64: 1, 128>}, {transform_indices = @transform_5, window_bounds = array<i64: 8, 128>}]} {
    %c0 = arith.constant 0 : index
    %c0_0 = arith.constant 0 : index
    %0 = vector.load %arg3[%c0, %c0_0] : memref<8x128xf32, #tpu.memory_space<vmem>>, vector<8x128xf32>
    %c0_1 = arith.constant 0 : index
    %c0_2 = arith.constant 0 : index
    %1 = vector.load %arg4[%c0_1, %c0_2] : memref<128x128xf32, #tpu.memory_space<vmem>>, vector<128x128xf32>
    %cst = arith.constant dense<0.000000e+00> : vector<8x128xf32>
    %2 = tpu.matmul %0, %1, %cst {dimension_numbers = #tpu.dot_dimension_numbers<[1], [0], [0], [1], [0, 0, 1, 1], [], []>} : vector<8x128xf32>, vector<128x128xf32>, vector<8x128xf32> -> vector<8x128xf32>
    %c0_3 = arith.constant 0 : index
    %c0_4 = arith.constant 0 : index
    %3 = vector.load %arg5[%c0_3, %c0_4] : memref<1x128xf32, #tpu.memory_space<vmem>>, vector<1x128xf32>
    %4 = vector.broadcast %3 : vector<1x128xf32> to vector<8x128xf32>
    %5 = arith.addf %2, %4 : vector<8x128xf32>
    %cst_5 = arith.constant 0.000000e+00 : f32
    %6 = vector.broadcast %cst_5 : f32 to vector<8x128xf32>
    %7 = arith.maximumf %5, %6 : vector<8x128xf32>
    %c0_6 = arith.constant 0 : index
    %c0_7 = arith.constant 0 : index
    %8 = vector.load %arg6[%c0_6, %c0_7] : memref<128x128xf32, #tpu.memory_space<vmem>>, vector<128x128xf32>
    %cst_8 = arith.constant dense<0.000000e+00> : vector<8x128xf32>
    %9 = tpu.matmul %7, %8, %cst_8 {dimension_numbers = #tpu.dot_dimension_numbers<[1], [0], [0], [1], [0, 0, 1, 1], [], []>} : vector<8x128xf32>, vector<128x128xf32>, vector<8x128xf32> -> vector<8x128xf32>
    %c0_9 = arith.constant 0 : index
    %c0_10 = arith.constant 0 : index
    %10 = vector.load %arg7[%c0_9, %c0_10] : memref<1x128xf32, #tpu.memory_space<vmem>>, vector<1x128xf32>
    %11 = vector.broadcast %10 : vector<1x128xf32> to vector<8x128xf32>
    %12 = arith.addf %9, %11 : vector<8x128xf32>
    %c0_11 = arith.constant 0 : index
    %c0_12 = arith.constant 0 : index
    %13 = vector.load %arg8[%c0_11, %c0_12] : memref<8x128xf32, #tpu.memory_space<vmem>>, vector<8x128xf32>
    tpu.vector_store %arg8[%c0_11, %c0_12], %12 {strides = array<i32>} : memref<8x128xf32, #tpu.memory_space<vmem>>, vector<8x128xf32>,
    return
  }
  func.func @transform_0(%arg0: i32, %arg1: i32, %arg2: i32) -> (i32, i32) {
    %c0_i32 = arith.constant 0 : i32
    %c0_i32_0 = arith.constant 0 : i32
    return %arg0, %c0_i32 : i32, i32
  }
  func.func @transform_1(%arg0: i32, %arg1: i32, %arg2: i32) -> (i32, i32) {
    %c0_i32 = arith.constant 0 : i32
    %c0_i32_0 = arith.constant 0 : i32
    return %c0_i32, %arg2 : i32, i32
  }
  func.func @transform_2(%arg0: i32, %arg1: i32, %arg2: i32) -> (i32, i32) {
    %c0_i32 = arith.constant 0 : i32
    %c0_i32_0 = arith.constant 0 : i32
    return %c0_i32, %arg2 : i32, i32
  }
  func.func @transform_3(%arg0: i32, %arg1: i32, %arg2: i32) -> (i32, i32) {
    %c0_i32 = arith.constant 0 : i32
    return %arg2, %arg1 : i32, i32
  }
  func.func @transform_4(%arg0: i32, %arg1: i32, %arg2: i32) -> (i32, i32) {
    %c0_i32 = arith.constant 0 : i32
    %c0_i32_0 = arith.constant 0 : i32
    return %c0_i32, %arg1 : i32, i32
  }
  func.func @transform_5(%arg0: i32, %arg1: i32, %arg2: i32) -> (i32, i32) {
    %c0_i32 = arith.constant 0 : i32
    return %arg0, %arg1 : i32, i32
  }
}

</mosaic_0001>

<llo_original>
// kernel: tpu_custom_call.1
$region0: #{tpu_custom_call.1}
  #allocation0 [shape = 'u32[]', space=smem, size = 0x4, offset = 0x4, fixed_abs, tag = 'smem constant byte address 0x4 - core index']
  #allocation1 [shape = 'u32[144,128]{1,0:T(1,128)}', space=vmem, size = 0x12000, scoped, tag = 'internal scratch']
  %s0 = inlined_call_operand.hbm [shape: f32[8,128], index: 0, kind: input, shape index: {}]
  %s1 = inlined_call_operand.hbm [shape: f32[128,128], index: 1, kind: input, shape index: {}]
  %s2 = inlined_call_operand.vmem [shape: f32[1,128], index: 2, kind: input, shape index: {}]
  %s3 = inlined_call_operand.hbm [shape: f32[128,128], index: 3, kind: input, shape index: {}]
  %s4 = inlined_call_operand.vmem [shape: f32[1,128], index: 4, kind: input, shape index: {}]
  %s5 = inlined_call_operand.hbm [shape: f32[8,128], index: 5, kind: output, shape index: {}]
  %s6 = sld [smem:[#allocation0]]
  $region42: #{tpu_custom_call.1} parent=0
    _
  %s8 = ssub.s32 1, %s6
  %s9 = scalar_select 0, %s8, %s6
  $region1: #{tpu_custom_call.1} parent=0
    #allocation2 [shape = 'u8[4096]{0}', space=vmem, size = 0x1000, scoped, tag = 'input window, operand 0, single buffered']
    #allocation3 [shape = 's32[1]{0}', space=sflag, size = 0x4, scoped, tag = 'scoped memory for tpu_custom_call.1']
    #allocation4 [shape = 's32[1]{0}', space=sflag, size = 0x4, scoped, tag = 'scoped memory for tpu_custom_call.1']
    #allocation5 [shape = 'u8[65536]{0}', space=vmem, size = 0x10000, scoped, tag = 'input window, operand 1, single buffered']
    #allocation6 [shape = 's32[1]{0}', space=sflag, size = 0x4, scoped, tag = 'scoped memory for tpu_custom_call.1']
    #allocation7 [shape = 'u8[65536]{0}', space=vmem, size = 0x10000, scoped, tag = 'input window, operand 3, single buffered']
    #allocation8 [shape = 'u8[4096]{0}', space=vmem, size = 0x1000, scoped, tag = 'output window, operand 0, single buffered']
    %10 = vsyncpa [#allocation3], 0
    %11 = vsyncpa [#allocation6], 0
    %12 = vsyncpa [#allocation4], 0
    // Predicated region
    $region2: #{tpu_custom_call.1} parent=1 // pred_check
      _
    $region3: #{tpu_custom_call.1} parent=1 // pred_check_branch
      %14 = sbr.rel (0) target = $region5
    $region4: #{tpu_custom_call.1} parent=1 // pred_region
      %s16 = ssub.s32 128, 128
      %17 = vsyncadd [#allocation3], %s16
      %s19 = sshll.u32 [#allocation2], 4
      %s20 = int_to_ptr.vmem [resolvable:$true] %s19
      %22 = dma.hbm_to_vmem [thread:$0]  %s0, 128, %s20, [#allocation3]
    $region5: #{tpu_custom_call.1} parent=1 // pred_fallthru
      _
    // Predicated region
    $region6: #{tpu_custom_call.1} parent=1 // pred_check
      _
    $region7: #{tpu_custom_call.1} parent=1 // pred_check_branch
      %24 = sbr.rel (0) target = $region9
    $region8: #{tpu_custom_call.1} parent=1 // pred_region
      %s26 = ssub.s32 2048, 2048
      %27 = vsyncadd [#allocation6], %s26
      %s28 = sshll.u32 [#allocation5], 4
      %s29 = int_to_ptr.vmem [resolvable:$true] %s28
      %34 = dma.hbm_to_vmem [thread:$0]  %s1, 2048, %s29, [#allocation6], 128, 128, 8
    $region9: #{tpu_custom_call.1} parent=1 // pred_fallthru
      _
    // Predicated region
    $region10: #{tpu_custom_call.1} parent=1 // pred_check
      _
    $region11: #{tpu_custom_call.1} parent=1 // pred_check_branch
      %36 = sbr.rel (0) target = $region13
    $region12: #{tpu_custom_call.1} parent=1 // pred_region
      _
    $region13: #{tpu_custom_call.1} parent=1 // pred_fallthru
      _
    // Predicated region
    $region14: #{tpu_custom_call.1} parent=1 // pred_check
      _
    $region15: #{tpu_custom_call.1} parent=1 // pred_check_branch
      %38 = sbr.rel (0) target = $region17
    $region16: #{tpu_custom_call.1} parent=1 // pred_region
      %s40 = ssub.s32 2048, 2048
      %41 = vsyncadd [#allocation6], %s40
      %s42 = sshll.u32 [#allocation7], 4
      %s43 = int_to_ptr.vmem [resolvable:$true] %s42
      %48 = dma.hbm_to_vmem [thread:$0]  %s3, 2048, %s43, [#allocation6], 128, 128, 8
    $region17: #{tpu_custom_call.1} parent=1 // pred_fallthru
      _
    // Predicated region
    $region18: #{tpu_custom_call.1} parent=1 // pred_check
      _
    $region19: #{tpu_custom_call.1} parent=1 // pred_check_branch
      %50 = sbr.rel (0) target = $region21
    $region20: #{tpu_custom_call.1} parent=1 // pred_region
      _
    $region21: #{tpu_custom_call.1} parent=1 // pred_fallthru
      _
    // Predicated region
    $region22: #{tpu_custom_call.1} parent=1 // pred_check
      _
    $region23: #{tpu_custom_call.1} parent=1 // pred_check_branch
      %52 = sbr.rel (0) target = $region25
    $region24: #{tpu_custom_call.1} parent=1 // pred_region
      %53 = dma.done [#allocation3], 128
    $region25: #{tpu_custom_call.1} parent=1 // pred_fallthru
      _
    // Predicated region
    $region26: #{tpu_custom_call.1} parent=1 // pred_check
      _
    $region27: #{tpu_custom_call.1} parent=1 // pred_check_branch
      %55 = sbr.rel (0) target = $region29
    $region28: #{tpu_custom_call.1} parent=1 // pred_region
      %56 = dma.done [#allocation6], 2048
    $region29: #{tpu_custom_call.1} parent=1 // pred_fallthru
      _
    // Predicated region
    $region30: #{tpu_custom_call.1} parent=1 // pred_check
      _
    $region31: #{tpu_custom_call.1} parent=1 // pred_check_branch
      %58 = sbr.rel (0) target = $region33
    $region32: #{tpu_custom_call.1} parent=1 // pred_region
      %59 = dma.done [#allocation6], 2048
    $region33: #{tpu_custom_call.1} parent=1 // pred_fallthru
      _
    %v60 = vld [vmem:[#allocation2] sm:$0xff]
    %v61 = vld [vmem:[#allocation5] sm:$0xff]
    %v62 = vld [vmem:[#allocation5 + $0x8] sm:$0xff]
    %v63 = vld [vmem:[#allocation5 + $0x10] sm:$0xff]
    %v64 = vld [vmem:[#allocation5 + $0x18] sm:$0xff]
    %v65 = vld [vmem:[#allocation5 + $0x20] sm:$0xff]
    %v66 = vld [vmem:[#allocation5 + $0x28] sm:$0xff]
    %v67 = vld [vmem:[#allocation5 + $0x30] sm:$0xff]
    %v68 = vld [vmem:[#allocation5 + $0x38] sm:$0xff]
    %v69 = vld [vmem:[#allocation5 + $0x40] sm:$0xff]
    %v70 = vld [vmem:[#allocation5 + $0x48] sm:$0xff]
    %v71 = vld [vmem:[#allocation5 + $0x50] sm:$0xff]
    %v72 = vld [vmem:[#allocation5 + $0x58] sm:$0xff]
    %v73 = vld [vmem:[#allocation5 + $0x60] sm:$0xff]
    %v74 = vld [vmem:[#allocation5 + $0x68] sm:$0xff]
    %v75 = vld [vmem:[#allocation5 + $0x70] sm:$0xff]
    %v76 = vld [vmem:[#allocation5 + $0x78] sm:$0xff]
    %v77 = vld [vmem:[%s2] sm:$0x1]
    %v79 = vlaneseq
    %v80 = vshrl.u32 %v79, 7
    %v81 = vsub.s32 0, %v80
    %v82 = vrot.slane %v77, %v81
    %84 = vmatprep.subr.mxu0 0.0
    %85 = vmatpush1.msra.mxu0 %v76
    %86 = vmatprep.subr.mxu0 0.0
    %87 = vmatpush1.msra.mxu0 %v75
    %88 = vmatprep.subr.mxu0 0.0
    %89 = vmatpush1.msra.mxu0 %v74
    %90 = vmatprep.subr.mxu0 0.0
    %91 = vmatpush1.msra.mxu0 %v73
    %92 = vmatprep.subr.mxu0 0.0
    %93 = vmatpush1.msra.mxu0 %v72
    %94 = vmatprep.subr.mxu0 0.0
    %95 = vmatpush1.msra.mxu0 %v71
    %96 = vmatprep.subr.mxu0 0.0
    %97 = vmatpush1.msra.mxu0 %v70
    %98 = vmatprep.subr.mxu0 0.0
    %99 = vmatpush1.msra.mxu0 %v69
    %100 = vmatprep.subr.mxu0 0.0
    %101 = vmatpush1.msra.mxu0 %v68
    %102 = vmatprep.subr.mxu0 0.0
    %103 = vmatpush1.msra.mxu0 %v67
    %104 = vmatprep.subr.mxu0 0.0
    %105 = vmatpush1.msra.mxu0 %v66
    %106 = vmatprep.subr.mxu0 0.0
    %107 = vmatpush1.msra.mxu0 %v65
    %108 = vmatprep.subr.mxu0 0.0
    %109 = vmatpush1.msra.mxu0 %v64
    %110 = vmatprep.subr.mxu0 0.0
    %111 = vmatpush1.msra.mxu0 %v63
    %112 = vmatprep.subr.mxu0 0.0
    %113 = vmatpush1.msra.mxu0 %v62
    %114 = vmatprep.subr.mxu0 0.0
    %115 = vmatpush1.msra.mxu0 %v61
    %116 = vmatprep.subr.mxu0 0.0
    %117 = vmatpush2.msra.mxu0 0.0
    %118 = vmatprep.subr.mxu0 0.0
    %119 = vmatpush2.msra.mxu0 0.0
    %120 = vmatprep.subr.mxu0 0.0
    %121 = vmatpush2.msra.mxu0 0.0
    %122 = vmatprep.subr.mxu0 0.0
    %123 = vmatpush2.msra.mxu0 0.0
    %124 = vmatprep.subr.mxu0 0.0
    %125 = vmatpush2.msra.mxu0 0.0
    %126 = vmatprep.subr.mxu0 0.0
    %127 = vmatpush2.msra.mxu0 0.0
    %128 = vmatprep.subr.mxu0 0.0
    %129 = vmatpush2.msra.mxu0 0.0
    %130 = vmatprep.subr.mxu0 0.0
    %131 = vmatpush2.msra.mxu0 0.0
    %132 = vmatprep.subr.mxu0 0.0
    %133 = vmatpush2.msra.mxu0 0.0
    %134 = vmatprep.subr.mxu0 0.0
    %135 = vmatpush2.msra.mxu0 0.0
    %136 = vmatprep.subr.mxu0 0.0
    %137 = vmatpush2.msra.mxu0 0.0
    %138 = vmatprep.subr.mxu0 0.0
    %139 = vmatpush2.msra.mxu0 0.0
    %140 = vmatprep.subr.mxu0 0.0
    %141 = vmatpush2.msra.mxu0 0.0
    %142 = vmatprep.subr.mxu0 0.0
    %143 = vmatpush2.msra.mxu0 0.0
    %144 = vmatprep.subr.mxu0 0.0
    %145 = vmatpush2.msra.mxu0 0.0
    %146 = vmatprep.subr.mxu0 0.0
    %147 = vmatpush2.msra.mxu0 0.0
    %148 = vmatprep.mubr.f32.mxu0 0.0
    %149 = vmatmul.mubr.f32.gmra.mxu0 %v60
    %v150 = vpop.f32.mrf.mxu0
    %v151 = vadd.f32 %v82, %v150
    %v152 = vpop.f32.mrf.mxu0
    %153 = vdwg.mxu0
    %v154 = vmax.f32 %v151, 0.0
    %v155 = vld [vmem:[#allocation7] sm:$0xff]
    %v156 = vld [vmem:[#allocation7 + $0x8] sm:$0xff]
    %v157 = vld [vmem:[#allocation7 + $0x10] sm:$0xff]
    %v158 = vld [vmem:[#allocation7 + $0x18] sm:$0xff]
    %v159 = vld [vmem:[#allocation7 + $0x20] sm:$0xff]
    %v160 = vld [vmem:[#allocation7 + $0x28] sm:$0xff]
    %v161 = vld [vmem:[#allocation7 + $0x30] sm:$0xff]
    %v162 = vld [vmem:[#allocation7 + $0x38] sm:$0xff]
    %v163 = vld [vmem:[#allocation7 + $0x40] sm:$0xff]
    %v164 = vld [vmem:[#allocation7 + $0x48] sm:$0xff]
    %v165 = vld [vmem:[#allocation7 + $0x50] sm:$0xff]
    %v166 = vld [vmem:[#allocation7 + $0x58] sm:$0xff]
    %v167 = vld [vmem:[#allocation7 + $0x60] sm:$0xff]
    %v168 = vld [vmem:[#allocation7 + $0x68] sm:$0xff]
    %v169 = vld [vmem:[#allocation7 + $0x70] sm:$0xff]
    %v170 = vld [vmem:[#allocation7 + $0x78] sm:$0xff]
    %v171 = vld [vmem:[%s4] sm:$0x1]
    %v173 = vlaneseq
    %v174 = vshrl.u32 %v173, 7
    %v175 = vsub.s32 0, %v174
    %v176 = vrot.slane %v171, %v175
    %178 = vmatprep.subr.mxu0 0.0
    %179 = vmatpush1.msra.mxu0 %v170
    %180 = vmatprep.subr.mxu0 0.0
    %181 = vmatpush1.msra.mxu0 %v169
    %182 = vmatprep.subr.mxu0 0.0
    %183 = vmatpush1.msra.mxu0 %v168
    %184 = vmatprep.subr.mxu0 0.0
    %185 = vmatpush1.msra.mxu0 %v167
    %186 = vmatprep.subr.mxu0 0.0
    %187 = vmatpush1.msra.mxu0 %v166
    %188 = vmatprep.subr.mxu0 0.0
    %189 = vmatpush1.msra.mxu0 %v165
    %190 = vmatprep.subr.mxu0 0.0
    %191 = vmatpush1.msra.mxu0 %v164
    %192 = vmatprep.subr.mxu0 0.0
    %193 = vmatpush1.msra.mxu0 %v163
    %194 = vmatprep.subr.mxu0 0.0
    %195 = vmatpush1.msra.mxu0 %v162
    %196 = vmatprep.subr.mxu0 0.0
    %197 = vmatpush1.msra.mxu0 %v161
    %198 = vmatprep.subr.mxu0 0.0
    %199 = vmatpush1.msra.mxu0 %v160
    %200 = vmatprep.subr.mxu0 0.0
    %201 = vmatpush1.msra.mxu0 %v159
    %202 = vmatprep.subr.mxu0 0.0
    %203 = vmatpush1.msra.mxu0 %v158
    %204 = vmatprep.subr.mxu0 0.0
    %205 = vmatpush1.msra.mxu0 %v157
    %206 = vmatprep.subr.mxu0 0.0
    %207 = vmatpush1.msra.mxu0 %v156
    %208 = vmatprep.subr.mxu0 0.0
    %209 = vmatpush1.msra.mxu0 %v155
    %210 = vmatprep.subr.mxu0 0.0
    %211 = vmatpush2.msra.mxu0 0.0
    %212 = vmatprep.subr.mxu0 0.0
    %213 = vmatpush2.msra.mxu0 0.0
    %214 = vmatprep.subr.mxu0 0.0
    %215 = vmatpush2.msra.mxu0 0.0
    %216 = vmatprep.subr.mxu0 0.0
    %217 = vmatpush2.msra.mxu0 0.0
    %218 = vmatprep.subr.mxu0 0.0
    %219 = vmatpush2.msra.mxu0 0.0
    %220 = vmatprep.subr.mxu0 0.0
    %221 = vmatpush2.msra.mxu0 0.0
    %222 = vmatprep.subr.mxu0 0.0
    %223 = vmatpush2.msra.mxu0 0.0
    %224 = vmatprep.subr.mxu0 0.0
    %225 = vmatpush2.msra.mxu0 0.0
    %226 = vmatprep.subr.mxu0 0.0
    %227 = vmatpush2.msra.mxu0 0.0
    %228 = vmatprep.subr.mxu0 0.0
    %229 = vmatpush2.msra.mxu0 0.0
    %230 = vmatprep.subr.mxu0 0.0
    %231 = vmatpush2.msra.mxu0 0.0
    %232 = vmatprep.subr.mxu0 0.0
    %233 = vmatpush2.msra.mxu0 0.0
    %234 = vmatprep.subr.mxu0 0.0
    %235 = vmatpush2.msra.mxu0 0.0
    %236 = vmatprep.subr.mxu0 0.0
    %237 = vmatpush2.msra.mxu0 0.0
    %238 = vmatprep.subr.mxu0 0.0
    %239 = vmatpush2.msra.mxu0 0.0
    %240 = vmatprep.subr.mxu0 0.0
    %241 = vmatpush2.msra.mxu0 0.0
    %242 = vmatprep.mubr.f32.mxu0 0.0
    %243 = vmatmul.mubr.f32.gmra.mxu0 %v154
    %v244 = vpop.f32.mrf.mxu0
    %v245 = vadd.f32 %v176, %v244
    %v246 = vpop.f32.mrf.mxu0
    %247 = vdwg.mxu0
    %248 = vst [vmem:[#allocation8] sm:$0xff] %v245
    // Predicated region
    $region34: #{tpu_custom_call.1} parent=1 // pred_check
      _
    $region35: #{tpu_custom_call.1} parent=1 // pred_check_branch
      %250 = sbr.rel (0) target = $region37
    $region36: #{tpu_custom_call.1} parent=1 // pred_region
      %s252 = ssub.s32 128, 128
      %253 = vsyncadd [#allocation4], %s252
      %s255 = sshll.u32 [#allocation8], 4
      %s256 = int_to_ptr.vmem [resolvable:$true] %s255
      %258 = dma.vmem_to_hbm [thread:$0]  %s256, 128, %s5, [#allocation4]
    $region37: #{tpu_custom_call.1} parent=1 // pred_fallthru
      _
    // Predicated region
    $region38: #{tpu_custom_call.1} parent=1 // pred_check
      _
    $region39: #{tpu_custom_call.1} parent=1 // pred_check_branch
      %260 = sbr.rel (0) target = $region41
    $region40: #{tpu_custom_call.1} parent=1 // pred_region
      %261 = dma.done [#allocation4], 128
    $region41: #{tpu_custom_call.1} parent=1 // pred_fallthru
      _
    %262 = vsyncpa [#allocation3], 1
    %263 = vsyncpa [#allocation6], 1
    %264 = vsyncpa [#allocation4], 1

</llo_original>
